<compile_context>
chip_gen: v7x
topology: tpu7x:2x2x1
jax: 0.10.0
libtpu: 0.0.40
codegen_flags: <defaults>
</compile_context>

<pallas_src>
import jax
import jax.numpy as jnp
from jax.experimental import pallas as pl
from jax.experimental.pallas import tpu as pltpu

_LANE = 128


def _round_up(x, m):
    return ((x + m - 1) // m) * m


def _cdiv(a, b):
    return (a + b - 1) // b


def _sublane(itemsize):
    # native tiles: (8,128) f32, (16,128) bf16, (32,128) int8/fp8
    return max(8, 32 // itemsize)


def _vmem_budget():
    """(vmem_limit_bytes, per-buffer s-tile target bytes), TPU-generation aware."""
    phys = None
    try:
        info = pltpu.get_tpu_info()
        phys = getattr(info, "vmem_capacity_bytes", None)
    except Exception:
        phys = None
    if phys is None:
        try:
            kind = jax.devices()[0].device_kind.lower()
        except Exception:
            kind = ""
        if "v7" in kind:
            phys = 64 << 20
        elif any(t in kind for t in ("v6", "v5", "v4")):
            phys = 128 << 20
        else:
            phys = 64 << 20  # unknown -> conservative
    if phys >= (100 << 20):        # v5e / v6e: 128 MiB physical VMEM
        return 64 << 20, 12 << 20
    if phys >= (48 << 20):         # v7x: 64 MiB per TensorCore
        return 48 << 20, 7 << 20
    return max(8 << 20, phys // 2), max(1 << 20, phys // 8)


def _block_vmem_bytes(tb, tn, tm, itemsize, sub):
    """Lane/sublane-padded VMEM footprint: 2x-buffered blocks + f32 scratch."""
    tn_l = _round_up(tn, _LANE)
    tm_l = _round_up(tm, _LANE)
    s_blk = tb * _round_up(tn, sub) * tm_l * itemsize
    ptgt_blk = tb * sub * tm_l * itemsize   # (tb, 2, tm): 2 sublanes pad to a tile
    psrc_blk = tb * sub * tn_l * itemsize   # (tb, 2, tn)
    d_blk = tb * sub * tn_l * itemsize
    acc_blk = tb * 8 * tn_l * 4             # f32 scratch (single buffered)
    return 2 * (s_blk + ptgt_blk + psrc_blk + d_blk) + acc_blk


def _choose_tiles(B, N, M, itemsize, sub, s_target, vmem_limit):
    usable = max(vmem_limit - (4 << 20), vmem_limit // 2)  # compiler headroom
    m_pad = _round_up(M, _LANE)
    min_tn = N if N <= _LANE else _LANE

    # Prefer keeping the whole contraction axis resident (no M tiling).
    if _round_up(min_tn, sub) * m_pad * itemsize <= s_target:
        tm = M
        rows = s_target // (m_pad * itemsize)
        tn = N if rows >= N else max(_LANE, (rows // _LANE) * _LANE)
    else:
        # Very large M: tile the contraction axis (accumulated in the kernel).
        tn = min_tn
        tm = (s_target // (_round_up(tn, sub) * itemsize)) // _LANE * _LANE
        tm = max(_LANE, min(tm, m_pad))
        if tm >= M:
            tm = M

    # Batch-block tiny problems into a single grid step.
    tb = 1
    if tn == N and tm == M and B * _round_up(N, sub) * m_pad * itemsize <= s_target:
        tb = B

    # Shrink until the padded, double-buffered footprint fits the VMEM limit.
    for _ in range(64):
        if _block_vmem_bytes(tb, tn, tm, itemsize, sub) <= usable:
            break
        if tb > 1:
            tb = max(1, tb // 2)
        elif tn > _LANE:
            tn = max(_LANE, ((tn // 2) // _LANE) * _LANE)
        elif tm > _LANE:
            tm = max(_LANE, ((tm // 2) // _LANE) * _LANE)
        else:
            break

    # Guarantee >=2 grid steps along a parallel axis for non-tiny problems so a
    # 2-TC chip (v7x) can shard the work; negligible cost on 1-TC chips.
    steps = _cdiv(B, tb) * _cdiv(N, tn) * _cdiv(M, tm)
    if steps == 1 and B * N * M * itemsize >= (2 << 20):
        if N > _LANE:
            tn = _round_up(_cdiv(N, 2), _LANE)
        elif B >= 2:
            tb = _cdiv(B, 2)

    return tb, tn, tm


def _disp_kernel_fused(s_ref, ptgt_ref, psrc_ref, d_ref):
    """Single-shot: d_t = P_tgt_t @ s^T - P_src_t  (contraction axis untiled)."""
    d = jnp.einsum(
        "bcm,bnm->bcn", ptgt_ref[...], s_ref[...],
        preferred_element_type=jnp.float32,
    )
    d_ref[...] = (d - psrc_ref[...].astype(jnp.float32)).astype(d_ref.dtype)


def _make_acc_kernel(M, tm):
    """M-tiled variant: f32 accumulator + masking of the padded M tail."""
    need_m_mask = (M % tm) != 0

    def kernel(s_ref, ptgt_ref, psrc_ref, d_ref, acc_ref):
        mt = pl.program_id(2)

        @pl.when(mt == 0)
        def _():
            acc_ref[...] = jnp.zeros_like(acc_ref)

        s = s_ref[...]
        pt = ptgt_ref[...]
        if need_m_mask:
            # Boundary M blocks read undefined padding; zero both operands'
            # out-of-range contraction columns so they contribute nothing.
            base = mt * tm
            s_col = jax.lax.broadcasted_iota(jnp.int32, s.shape, 2) + base
            s = jnp.where(s_col < M, s, jnp.zeros_like(s))
            p_col = jax.lax.broadcasted_iota(jnp.int32, pt.shape, 2) + base
            pt = jnp.where(p_col < M, pt, jnp.zeros_like(pt))

        acc_ref[...] += jnp.einsum(
            "bcm,bnm->bcn", pt, s, preferred_element_type=jnp.float32
        )

        @pl.when(mt == pl.num_programs(2) - 1)
        def _():
            d_ref[...] = (
                acc_ref[...] - psrc_ref[...].astype(jnp.float32)
            ).astype(d_ref.dtype)

    return kernel


def displacement(s, P_src, P_tgt, ns_gt=None, *, _tiles=None):
    """Pallas implementation of Displacement.forward -> (d, grad_mask)."""
    B, N, M = s.shape

    # grad_mask depends only on ns_gt and P_src's shape/dtype: broadcasted
    # compare in the wrapper (keeps the kernel a single output stream).
    if ns_gt is None:
        grad_mask = None
    else:
        ns = jnp.asarray(ns_gt, dtype=jnp.int32)
        row_ids = jnp.arange(P_src.shape[1], dtype=jnp.int32)[None, :, None]
        grad_mask = jnp.broadcast_to(
            (row_ids < ns[:, None, None]).astype(P_src.dtype), P_src.shape
        )

    P_src_k = P_src if P_src.shape[1] == N else P_src[:, :N, :]

    # Lane-dense layout for the narrow (size-2) coordinate axis.
    ptgt_t = jnp.swapaxes(P_tgt, 1, 2)    # [B, 2, M]
    psrc_t = jnp.swapaxes(P_src_k, 1, 2)  # [B, 2, N]

    itemsize = jnp.dtype(s.dtype).itemsize
    sub = _sublane(itemsize)
    vmem_limit, s_target = _vmem_budget()
    if _tiles is None:
        tb, tn, tm = _choose_tiles(B, N, M, itemsize, sub, s_target, vmem_limit)
    else:
        tb, tn, tm = _tiles

    grid = (_cdiv(B, tb), _cdiv(N, tn), _cdiv(M, tm))
    m_tiled = grid[2] > 1

    if m_tiled:
        kernel = _make_acc_kernel(M, tm)
        scratch_shapes = [pltpu.VMEM((tb, 2, tn), jnp.float32)]
    else:
        kernel = _disp_kernel_fused
        scratch_shapes = []

    cost = pl.CostEstimate(
        flops=4 * B * N * M,
        transcendentals=0,
        bytes_accessed=(B * N * M + 2 * B * M + 2 * 2 * B * N) * itemsize,
    )

    d_t = pl.pallas_call(
        kernel,
        out_shape=jax.ShapeDtypeStruct((B, 2, N), s.dtype),
        grid_spec=pltpu.PrefetchScalarGridSpec(
            num_scalar_prefetch=0,
            grid=grid,
            in_specs=[
                pl.BlockSpec((tb, tn, tm), lambda bt, nt, mt: (bt, nt, mt)),  # s
                pl.BlockSpec((tb, 2, tm), lambda bt, nt, mt: (bt, 0, mt)),    # P_tgt^T
                pl.BlockSpec((tb, 2, tn), lambda bt, nt, mt: (bt, 0, nt)),    # P_src^T
            ],
            out_specs=pl.BlockSpec((tb, 2, tn), lambda bt, nt, mt: (bt, 0, nt)),
            scratch_shapes=scratch_shapes,
        ),
        compiler_params=pltpu.CompilerParams(
            dimension_semantics=("parallel", "parallel", "arbitrary"),
            vmem_limit_bytes=vmem_limit,
        ),
        cost_estimate=cost,
    )(s, ptgt_t, psrc_t)

    d = jnp.swapaxes(d_t, 1, 2)  # back to [B, N, 2]
    return d, grad_mask


if __name__ == "__main__":
    key = jax.random.PRNGKey(0)
    k1, k2, k3, k4, k5, k6, k7, k8, k9 = jax.random.split(key, 9)

    # ---- Test 1: tiny problem (batch-blocked into a single grid step) ----
    B, N, M = 2, 8, 8
    s_raw = jax.random.uniform(k1, (B, N, M), dtype=jnp.float32)
    s = s_raw / jnp.sum(s_raw, axis=-1, keepdims=True)
    P_src = jax.random.normal(k2, (B, N, 2), dtype=jnp.float32)
    P_tgt = jax.random.normal(k3, (B, M, 2), dtype=jnp.float32)
    ns_gt = jnp.array([5, 8], dtype=jnp.int32)

    d0, mask0 = displacement(s, P_src, P_tgt, None)
    d0 = jax.block_until_ready(d0)
    assert mask0 is None

    d1, mask1 = displacement(s, P_src, P_tgt, ns_gt)
    d1 = jax.block_until_ready(d1)
    mask1 = jax.block_until_ready(mask1)

    d_ref = jnp.matmul(s, P_tgt) - P_src
    row_ids = jnp.arange(N)[None, :, None]
    mask_ref = jnp.broadcast_to(
        (row_ids < ns_gt[:, None, None]).astype(P_src.dtype), P_src.shape
    )
    assert jnp.allclose(d0, d_ref, atol=1e-5)
    assert jnp.allclose(d1, d_ref, atol=1e-5)
    assert jnp.allclose(mask1, mask_ref)

    # ---- Test 2: moderate shapes, P_src with extra (dummy) rows, None path ----
    B2, N2, M2, Nfull2 = 3, 64, 48, 80
    s2_raw = jax.random.uniform(k4, (B2, N2, M2), dtype=jnp.float32)
    s2 = s2_raw / jnp.sum(s2_raw, axis=-1, keepdims=True)
    P_src2 = jax.random.normal(k5, (B2, Nfull2, 2), dtype=jnp.float32)
    P_tgt2 = jax.random.normal(k6, (B2, M2, 2), dtype=jnp.float32)

    d2, mask2 = displacement(s2, P_src2, P_tgt2, None)
    d2 = jax.block_until_ready(d2)
    assert mask2 is None
    d2_ref = jnp.matmul(s2, P_tgt2) - P_src2[:, :N2, :]
    assert jnp.allclose(d2, d2_ref, atol=1e-5)

    # ---- Test 2b: moderate shapes with ns_gt ----
    ns_gt2 = jnp.array([10, 64, 0], dtype=jnp.int32)
    P_src2b = P_src2[:, :N2, :]
    d3, mask3 = displacement(s2, P_src2b, P_tgt2, ns_gt2)
    d3 = jax.block_until_ready(d3)
    mask3 = jax.block_until_ready(mask3)
    row_ids2 = jnp.arange(N2)[None, :, None]
    mask3_ref = jnp.broadcast_to(
        (row_ids2 < ns_gt2[:, None, None]).astype(P_src2b.dtype), P_src2b.shape
    )
    assert jnp.allclose(d3, jnp.matmul(s2, P_tgt2) - P_src2b, atol=1e-5)
    assert jnp.allclose(mask3, mask3_ref)

    # ---- Test 3: forced small tiles -> exercises partial N blocks, the tiled
    #      M (accumulator) path and the padded-tail masking. ----
    B3, N3, M3 = 2, 200, 176
    s3_raw = jax.random.uniform(k7, (B3, N3, M3), dtype=jnp.float32)
    s3 = s3_raw / jnp.sum(s3_raw, axis=-1, keepdims=True)
    P_src3 = jax.random.normal(k8, (B3, N3, 2), dtype=jnp.float32)
    P_tgt3 = jax.random.normal(k9, (B3, M3, 2), dtype=jnp.float32)
    d4, _ = displacement(s3, P_src3, P_tgt3, None, _tiles=(1, 128, 128))
    d4 = jax.block_until_ready(d4)
    d4_ref = jnp.matmul(s3, P_tgt3) - P_src3
    assert jnp.allclose(d4, d4_ref, atol=1e-4)

    # ---- Test 4: bf16 inputs ----
    s4 = s2[:, :24, :40].astype(jnp.bfloat16)
    P_src4 = P_src2[:, :24, :].astype(jnp.bfloat16)
    P_tgt4 = P_tgt2[:, :40, :].astype(jnp.bfloat16)
    d5, _ = displacement(s4, P_src4, P_tgt4, None)
    d5 = jax.block_until_ready(d5)
    d5_ref = (
        jnp.matmul(s4.astype(jnp.float32), P_tgt4.astype(jnp.float32))
        - P_src4.astype(jnp.float32)
    )
    assert jnp.allclose(d5.astype(jnp.float32), d5_ref, atol=2e-2)

    print("KERNEL_OK")
</pallas_src>

<mosaic_0001>
module attributes {stable_mosaic.version = 11 : i64} {
  func.func @_disp_kernel_fused(%arg0: i32, %arg1: i32, %arg2: i32, %arg3: memref<2x8x8xf32, #tpu.memory_space<vmem>>, %arg4: memref<2x2x8xf32, #tpu.memory_space<vmem>>, %arg5: memref<2x2x8xf32, #tpu.memory_space<vmem>>, %arg6: memref<2x2x8xf32, #tpu.memory_space<vmem>>) attributes {dimension_semantics = [#tpu.dimension_semantics<parallel>, #tpu.dimension_semantics<parallel>, #tpu.dimension_semantics<arbitrary>], iteration_bounds = array<i64: 1, 1, 1>, scalar_prefetch = 0 : i64, scratch_operands = 0 : i64, tpu.core_type = #tpu.core_type<tc>, window_params = [{transform_indices = @transform_0, window_bounds = array<i64: 2, 8, 8>}, {transform_indices = @transform_1, window_bounds = array<i64: 2, 2, 8>}, {transform_indices = @transform_2, window_bounds = array<i64: 2, 2, 8>}, {transform_indices = @transform_3, window_bounds = array<i64: 2, 2, 8>}]} {
    %c0 = arith.constant 0 : index
    %c0_0 = arith.constant 0 : index
    %c0_1 = arith.constant 0 : index
    %0 = vector.load %arg4[%c0, %c0_0, %c0_1] : memref<2x2x8xf32, #tpu.memory_space<vmem>>, vector<2x2x8xf32>
    %c0_2 = arith.constant 0 : index
    %c0_3 = arith.constant 0 : index
    %c0_4 = arith.constant 0 : index
    %1 = vector.load %arg3[%c0_2, %c0_3, %c0_4] : memref<2x8x8xf32, #tpu.memory_space<vmem>>, vector<2x8x8xf32>
    "tpu.trace_start"() <{level = 10 : i32, message = "bcm,bnm->bcn"}> : () -> ()
    %cst = arith.constant dense<0.000000e+00> : vector<2x2x8xf32>
    %2 = tpu.matmul %0, %1, %cst {dimension_numbers = #tpu.dot_dimension_numbers<[2], [2], [1], [1], [0, 0, 0, 1, 1, 1], [0], [0]>} : vector<2x2x8xf32>, vector<2x8x8xf32>, vector<2x2x8xf32> -> vector<2x2x8xf32>
    "tpu.trace_stop"() : () -> ()
    %c0_5 = arith.constant 0 : index
    %c0_6 = arith.constant 0 : index
    %c0_7 = arith.constant 0 : index
    %3 = vector.load %arg5[%c0_5, %c0_6, %c0_7] : memref<2x2x8xf32, #tpu.memory_space<vmem>>, vector<2x2x8xf32>
    %4 = arith.subf %2, %3 : vector<2x2x8xf32>
    %c0_8 = arith.constant 0 : index
    %c0_9 = arith.constant 0 : index
    %c0_10 = arith.constant 0 : index
    %5 = vector.load %arg6[%c0_8, %c0_9, %c0_10] : memref<2x2x8xf32, #tpu.memory_space<vmem>>, vector<2x2x8xf32>
    tpu.vector_store %arg6[%c0_8, %c0_9, %c0_10], %4 {strides = array<i32>} : memref<2x2x8xf32, #tpu.memory_space<vmem>>, vector<2x2x8xf32>,
    return
  }
  func.func @transform_0(%arg0: i32, %arg1: i32, %arg2: i32) -> (i32, i32, i32) {
    %c0_i32 = arith.constant 0 : i32
    return %arg0, %arg1, %arg2 : i32, i32, i32
  }
  func.func @transform_1(%arg0: i32, %arg1: i32, %arg2: i32) -> (i32, i32, i32) {
    %c0_i32 = arith.constant 0 : i32
    %c0_i32_0 = arith.constant 0 : i32
    return %arg0, %c0_i32, %arg2 : i32, i32, i32
  }
  func.func @transform_2(%arg0: i32, %arg1: i32, %arg2: i32) -> (i32, i32, i32) {
    %c0_i32 = arith.constant 0 : i32
    %c0_i32_0 = arith.constant 0 : i32
    return %arg0, %c0_i32, %arg1 : i32, i32, i32
  }
  func.func @transform_3(%arg0: i32, %arg1: i32, %arg2: i32) -> (i32, i32, i32) {
    %c0_i32 = arith.constant 0 : i32
    %c0_i32_0 = arith.constant 0 : i32
    return %arg0, %c0_i32, %arg1 : i32, i32, i32
  }
}

</mosaic_0001>

<llo_original>
// kernel: tpu_custom_call.1
$region0: #{tpu_custom_call.1}
  #allocation0 [shape = 'u32[]', space=smem, size = 0x4, offset = 0x4, fixed_abs, tag = 'smem constant byte address 0x4 - core index']
  #allocation1 [shape = 'u32[144,128]{1,0:T(1,128)}', space=vmem, size = 0x12000, scoped, tag = 'internal scratch']
  %s0 = inlined_call_operand.hbm [shape: f32[2,8,8], index: 0, kind: input, shape index: {}]
  %s1 = inlined_call_operand.hbm [shape: f32[2,2,8], index: 1, kind: input, shape index: {}]
  %s2 = inlined_call_operand.vmem [shape: f32[2,2,8], index: 2, kind: input, shape index: {}]
  %s3 = inlined_call_operand.hbm [shape: f32[2,2,8], index: 3, kind: output, shape index: {}]
  %s4 = sld [smem:[#allocation0]]
  $region30: #{tpu_custom_call.1} parent=0
    _
  %s6 = ssub.s32 1, %s4
  %s7 = scalar_select 0, %s6, %s4
  $region1: #{tpu_custom_call.1} parent=0
    #allocation2 [shape = 'u8[8192]{0}', space=vmem, size = 0x2000, scoped, tag = 'input window, operand 0, single buffered']
    #allocation3 [shape = 's32[1]{0}', space=sflag, size = 0x4, scoped, tag = 'scoped memory for tpu_custom_call.1']
    #allocation4 [shape = 's32[1]{0}', space=sflag, size = 0x4, scoped, tag = 'scoped memory for tpu_custom_call.1']
    #allocation5 [shape = 'u8[2048]{0}', space=vmem, size = 0x800, scoped, tag = 'input window, operand 1, single buffered']
    #allocation6 [shape = 's32[1]{0}', space=sflag, size = 0x4, scoped, tag = 'scoped memory for tpu_custom_call.1']
    #allocation7 [shape = 'u8[2048]{0}', space=vmem, size = 0x800, scoped, tag = 'output window, operand 0, single buffered']
    %8 = vsyncpa [#allocation3], 0
    %9 = vsyncpa [#allocation6], 0
    %10 = vsyncpa [#allocation4], 0
    // Predicated region
    $region2: #{tpu_custom_call.1} parent=1 // pred_check
      _
    $region3: #{tpu_custom_call.1} parent=1 // pred_check_branch
      %12 = sbr.rel (0) target = $region5
    $region4: #{tpu_custom_call.1} parent=1 // pred_region
      %s14 = ssub.s32 256, 256
      %15 = vsyncadd [#allocation3], %s14
      %s16 = sshll.u32 [#allocation2], 4
      %s17 = int_to_ptr.vmem [resolvable:$true] %s16
      %22 = dma.hbm_to_vmem [thread:$0]  %s0, 256, %s17, [#allocation3], 128, 128, 8
    $region5: #{tpu_custom_call.1} parent=1 // pred_fallthru
      _
    // Predicated region
    $region6: #{tpu_custom_call.1} parent=1 // pred_check
      _
    $region7: #{tpu_custom_call.1} parent=1 // pred_check_branch
      %24 = sbr.rel (0) target = $region9
    $region8: #{tpu_custom_call.1} parent=1 // pred_region
      %s26 = ssub.s32 64, 64
      %27 = vsyncadd [#allocation6], %s26
      %s28 = sshll.u32 [#allocation5], 4
      %s29 = int_to_ptr.vmem [resolvable:$true] %s28
      %34 = dma.hbm_to_vmem [thread:$0]  %s1, 64, %s29, [#allocation6], 32, 32, 2
    $region9: #{tpu_custom_call.1} parent=1 // pred_fallthru
      _
    // Predicated region
    $region10: #{tpu_custom_call.1} parent=1 // pred_check
      _
    $region11: #{tpu_custom_call.1} parent=1 // pred_check_branch
      %36 = sbr.rel (0) target = $region13
    $region12: #{tpu_custom_call.1} parent=1 // pred_region
      _
    $region13: #{tpu_custom_call.1} parent=1 // pred_fallthru
      _
    // Predicated region
    $region14: #{tpu_custom_call.1} parent=1 // pred_check
      _
    $region15: #{tpu_custom_call.1} parent=1 // pred_check_branch
      %38 = sbr.rel (0) target = $region17
    $region16: #{tpu_custom_call.1} parent=1 // pred_region
      %39 = dma.done [#allocation3], 256
    $region17: #{tpu_custom_call.1} parent=1 // pred_fallthru
      _
    // Predicated region
    $region18: #{tpu_custom_call.1} parent=1 // pred_check
      _
    $region19: #{tpu_custom_call.1} parent=1 // pred_check_branch
      %41 = sbr.rel (0) target = $region21
    $region20: #{tpu_custom_call.1} parent=1 // pred_region
      %42 = dma.done [#allocation6], 64
    $region21: #{tpu_custom_call.1} parent=1 // pred_fallthru
      _
    %v43 = vld [vmem:[#allocation5] sm:$0x3]
    %v44 = vld [vmem:[#allocation5 + $0x2] sm:$0x3]
    %v45 = vld [vmem:[#allocation2] sm:$0xff]
    %v46 = vld [vmem:[#allocation2 + $0x8] sm:$0xff]
    %vm47 = vcmask 64512
    %v49 = vsel %vm47, %v43, 0
    %v52 = vsel %vm47, %v45, 0
    %54 = vmatprep.subr.mxu0 0.0
    %55 = vmatpush1.xpose.msra.mxu0 %v52
    %56 = vmatprep.subr.mxu0 0.0
    %57 = vmatpush1.xpose.msra.mxu0 0.0
    %58 = vmatprep.subr.mxu0 0.0
    %59 = vmatpush1.xpose.msra.mxu0 0.0
    %60 = vmatprep.subr.mxu0 0.0
    %61 = vmatpush1.xpose.msra.mxu0 0.0
    %62 = vmatprep.subr.mxu0 0.0
    %63 = vmatpush1.xpose.msra.mxu0 0.0
    %64 = vmatprep.subr.mxu0 0.0
    %65 = vmatpush1.xpose.msra.mxu0 0.0
    %66 = vmatprep.subr.mxu0 0.0
    %67 = vmatpush1.xpose.msra.mxu0 0.0
    %68 = vmatprep.subr.mxu0 0.0
    %69 = vmatpush1.xpose.msra.mxu0 0.0
    %70 = vmatprep.subr.mxu0 0.0
    %71 = vmatpush1.xpose.msra.mxu0 0.0
    %72 = vmatprep.subr.mxu0 0.0
    %73 = vmatpush1.xpose.msra.mxu0 0.0
    %74 = vmatprep.subr.mxu0 0.0
    %75 = vmatpush1.xpose.msra.mxu0 0.0
    %76 = vmatprep.subr.mxu0 0.0
    %77 = vmatpush1.xpose.msra.mxu0 0.0
    %78 = vmatprep.subr.mxu0 0.0
    %79 = vmatpush1.xpose.msra.mxu0 0.0
    %80 = vmatprep.subr.mxu0 0.0
    %81 = vmatpush1.xpose.msra.mxu0 0.0
    %82 = vmatprep.subr.mxu0 0.0
    %83 = vmatpush1.xpose.msra.mxu0 0.0
    %84 = vmatprep.subr.mxu0 0.0
    %85 = vmatpush1.xpose.msra.mxu0 0.0
    %86 = vmatprep.subr.mxu0 0.0
    %87 = vmatpush1.xpose.msra.mxu0 0.0
    %88 = vmatprep.subr.mxu0 0.0
    %89 = vmatpush1.xpose.msra.mxu0 0.0
    %90 = vmatprep.subr.mxu0 0.0
    %91 = vmatpush1.xpose.msra.mxu0 0.0
    %92 = vmatprep.subr.mxu0 0.0
    %93 = vmatpush1.xpose.msra.mxu0 0.0
    %94 = vmatprep.subr.mxu0 0.0
    %95 = vmatpush1.xpose.msra.mxu0 0.0
    %96 = vmatprep.subr.mxu0 0.0
    %97 = vmatpush1.xpose.msra.mxu0 0.0
    %98 = vmatprep.subr.mxu0 0.0
    %99 = vmatpush1.xpose.msra.mxu0 0.0
    %100 = vmatprep.subr.mxu0 0.0
    %101 = vmatpush1.xpose.msra.mxu0 0.0
    %102 = vmatprep.subr.mxu0 0.0
    %103 = vmatpush1.xpose.msra.mxu0 0.0
    %104 = vmatprep.subr.mxu0 0.0
    %105 = vmatpush1.xpose.msra.mxu0 0.0
    %106 = vmatprep.subr.mxu0 0.0
    %107 = vmatpush1.xpose.msra.mxu0 0.0
    %108 = vmatprep.subr.mxu0 0.0
    %109 = vmatpush1.xpose.msra.mxu0 0.0
    %110 = vmatprep.subr.mxu0 0.0
    %111 = vmatpush1.xpose.msra.mxu0 0.0
    %112 = vmatprep.subr.mxu0 0.0
    %113 = vmatpush1.xpose.msra.mxu0 0.0
    %114 = vmatprep.subr.mxu0 0.0
    %115 = vmatpush1.xpose.msra.mxu0 0.0
    %116 = vmatprep.subr.mxu0 0.0
    %117 = vmatpush1.xpose.msra.mxu0 0.0
    %118 = vmatprep.mubr.f32.mxu0 0.0
    %119 = vmatmul.mubr.f32.gmra.mrb[0].mxu0 %v49
    %v120 = vpop.f32.mrb[0].mxu0
    %v121 = vadd.f32 0.0, %v120
    %v122 = vpop.f32.mrb[0].mxu0
    %123 = vdwg.mxu0
    %v125 = vsel %vm47, %v44, 0
    %v128 = vsel %vm47, %v46, 0
    %130 = vmatprep.subr.mxu0 0.0
    %131 = vmatpush1.xpose.msra.mxu0 %v128
    %132 = vmatprep.subr.mxu0 0.0
    %133 = vmatpush1.xpose.msra.mxu0 0.0
    %134 = vmatprep.subr.mxu0 0.0
    %135 = vmatpush1.xpose.msra.mxu0 0.0
    %136 = vmatprep.subr.mxu0 0.0
    %137 = vmatpush1.xpose.msra.mxu0 0.0
    %138 = vmatprep.subr.mxu0 0.0
    %139 = vmatpush1.xpose.msra.mxu0 0.0
    %140 = vmatprep.subr.mxu0 0.0
    %141 = vmatpush1.xpose.msra.mxu0 0.0
    %142 = vmatprep.subr.mxu0 0.0
    %143 = vmatpush1.xpose.msra.mxu0 0.0
    %144 = vmatprep.subr.mxu0 0.0
    %145 = vmatpush1.xpose.msra.mxu0 0.0
    %146 = vmatprep.subr.mxu0 0.0
    %147 = vmatpush1.xpose.msra.mxu0 0.0
    %148 = vmatprep.subr.mxu0 0.0
    %149 = vmatpush1.xpose.msra.mxu0 0.0
    %150 = vmatprep.subr.mxu0 0.0
    %151 = vmatpush1.xpose.msra.mxu0 0.0
    %152 = vmatprep.subr.mxu0 0.0
    %153 = vmatpush1.xpose.msra.mxu0 0.0
    %154 = vmatprep.subr.mxu0 0.0
    %155 = vmatpush1.xpose.msra.mxu0 0.0
    %156 = vmatprep.subr.mxu0 0.0
    %157 = vmatpush1.xpose.msra.mxu0 0.0
    %158 = vmatprep.subr.mxu0 0.0
    %159 = vmatpush1.xpose.msra.mxu0 0.0
    %160 = vmatprep.subr.mxu0 0.0
    %161 = vmatpush1.xpose.msra.mxu0 0.0
    %162 = vmatprep.subr.mxu0 0.0
    %163 = vmatpush1.xpose.msra.mxu0 0.0
    %164 = vmatprep.subr.mxu0 0.0
    %165 = vmatpush1.xpose.msra.mxu0 0.0
    %166 = vmatprep.subr.mxu0 0.0
    %167 = vmatpush1.xpose.msra.mxu0 0.0
    %168 = vmatprep.subr.mxu0 0.0
    %169 = vmatpush1.xpose.msra.mxu0 0.0
    %170 = vmatprep.subr.mxu0 0.0
    %171 = vmatpush1.xpose.msra.mxu0 0.0
    %172 = vmatprep.subr.mxu0 0.0
    %173 = vmatpush1.xpose.msra.mxu0 0.0
    %174 = vmatprep.subr.mxu0 0.0
    %175 = vmatpush1.xpose.msra.mxu0 0.0
    %176 = vmatprep.subr.mxu0 0.0
    %177 = vmatpush1.xpose.msra.mxu0 0.0
    %178 = vmatprep.subr.mxu0 0.0
    %179 = vmatpush1.xpose.msra.mxu0 0.0
    %180 = vmatprep.subr.mxu0 0.0
    %181 = vmatpush1.xpose.msra.mxu0 0.0
    %182 = vmatprep.subr.mxu0 0.0
    %183 = vmatpush1.xpose.msra.mxu0 0.0
    %184 = vmatprep.subr.mxu0 0.0
    %185 = vmatpush1.xpose.msra.mxu0 0.0
    %186 = vmatprep.subr.mxu0 0.0
    %187 = vmatpush1.xpose.msra.mxu0 0.0
    %188 = vmatprep.subr.mxu0 0.0
    %189 = vmatpush1.xpose.msra.mxu0 0.0
    %190 = vmatprep.subr.mxu0 0.0
    %191 = vmatpush1.xpose.msra.mxu0 0.0
    %192 = vmatprep.subr.mxu0 0.0
    %193 = vmatpush1.xpose.msra.mxu0 0.0
    %194 = vmatprep.mubr.f32.mxu0 0.0
    %195 = vmatmul.mubr.f32.gmra.mrb[0].mxu0 %v125
    %v196 = vpop.f32.mrb[0].mxu0
    %v197 = vadd.f32 0.0, %v196
    %v198 = vpop.f32.mrb[0].mxu0
    %199 = vdwg.mxu0
    %v200 = vld [vmem:[%s2] sm:$0x3]
    %v201 = vld [vmem:[%s2 + $0x2] sm:$0x3]
    %v202 = vsub.f32 %v121, %v200
    %v203 = vsub.f32 %v197, %v201
    %vm204 = vcmask 58368
    %205 = vst.msk [vmem:[#allocation7] sm:$0x3] %vm204, %v202
    %206 = vst.msk [vmem:[#allocation7 + $0x2] sm:$0x3] %vm204, %v203
    // Predicated region
    $region22: #{tpu_custom_call.1} parent=1 // pred_check
      _
    $region23: #{tpu_custom_call.1} parent=1 // pred_check_branch
      %208 = sbr.rel (0) target = $region25
    $region24: #{tpu_custom_call.1} parent=1 // pred_region
      %s210 = ssub.s32 64, 64
      %211 = vsyncadd [#allocation4], %s210
      %s212 = sshll.u32 [#allocation7], 4
      %s213 = int_to_ptr.vmem [resolvable:$true] %s212
      %218 = dma.vmem_to_hbm [thread:$0]  %s213, 64, %s3, [#allocation4], 32, 32, 2
    $region25: #{tpu_custom_call.1} parent=1 // pred_fallthru
      _
    // Predicated region
    $region26: #{tpu_custom_call.1} parent=1 // pred_check
      _
    $region27: #{tpu_custom_call.1} parent=1 // pred_check_branch
      %220 = sbr.rel (0) target = $region29
    $region28: #{tpu_custom_call.1} parent=1 // pred_region
      %221 = dma.done [#allocation4], 64
    $region29: #{tpu_custom_call.1} parent=1 // pred_fallthru
      _
    %222 = vsyncpa [#allocation3], 1
    %223 = vsyncpa [#allocation6], 1
    %224 = vsyncpa [#allocation4], 1

</llo_original>
